<compile_context>
chip_gen: v5e
topology: v5e:2x2
jax: 0.10.0
libtpu: 0.0.40
codegen_flags: <defaults>
</compile_context>

<pallas_src>
import math
from functools import partial

import jax
import jax.numpy as jnp
from jax import lax
from jax.experimental import pallas as pl
from jax.experimental.pallas import tpu as pltpu


def _mha_kernel(x_ref, wqkv_ref, wo_ref, o_ref, kv_ref,
                *, n_heads, d_k, block_q, compute_dtype):
    D = n_heads * d_k
    sq = pl.program_id(1)

    # K/V for the whole sequence (all heads), computed once per batch at the
    # first query tile, kept resident in VMEM across the query-tile axis.
    @pl.when(sq == 0)
    def _():
        x_full = x_ref[0].astype(compute_dtype)                      # (S, D)
        w_kv = wqkv_ref[:, pl.ds(D, 2 * D)]                          # (D, 2D) resident weights
        kv = jnp.dot(x_full, w_kv, preferred_element_type=jnp.float32)
        kv_ref[...] = kv.astype(compute_dtype)                       # (S, 2D) = [K | V]

    # Q projection for this query tile (1/sqrt(d_k) already folded into Wq).
    q_start = pl.multiple_of(sq * block_q, block_q)
    x_q = x_ref[0, pl.ds(q_start, block_q), :].astype(compute_dtype)  # (block_q, D)
    q = jnp.dot(x_q, wqkv_ref[:, pl.ds(0, D)],
                preferred_element_type=jnp.float32).astype(compute_dtype)

    # Heads are few and static: an unrolled Python loop keeps all slices static
    # (no dynamic cross-lane slicing) and each head's temporaries die before the
    # next head; the cross-head sum stays in-step (no VMEM accumulator RMW).
    out_acc = None
    for h in range(n_heads):
        lo = h * d_k
        q_h = q[:, lo:lo + d_k]                                       # (block_q, d_k)
        k_h = kv_ref[:, pl.ds(lo, d_k)]                               # (S, d_k)
        v_h = kv_ref[:, pl.ds(D + lo, d_k)]                           # (S, d_k)

        # scores = q_h @ k_h^T without materializing a transpose.
        s = lax.dot_general(q_h, k_h, (((1,), (1,)), ((), ())),
                            preferred_element_type=jnp.float32)       # (block_q, S)
        # TODO(synk): optional mask would be a single jnp.where on s here.

        # Numerically stable softmax; normalize the (block_q, d_k) context with
        # the EUP approximate reciprocal instead of the (block_q, S) probs.
        m = jnp.max(s, axis=-1, keepdims=True)
        p = jnp.exp(s - m)
        l = jnp.sum(p, axis=-1, keepdims=True)
        ctx = jnp.dot(p.astype(compute_dtype), v_h,
                      preferred_element_type=jnp.float32)              # (block_q, d_k)
        ctx = ctx * pl.reciprocal(l, approx=True)

        # This head's contribution to the output projection:
        #   out += ctx_h @ Wo.T[h*d_k:(h+1)*d_k, :]
        contrib = jnp.dot(ctx.astype(compute_dtype), wo_ref[pl.ds(lo, d_k), :],
                          preferred_element_type=jnp.float32)          # (block_q, D)
        out_acc = contrib if out_acc is None else out_acc + contrib

    # Single lane-dense (block_q, D) store per grid step.
    o_ref[0] = out_acc.astype(o_ref.dtype)


def _prepare_weights(wq, wk, wv, wo, scale, compute_dtype):
    """nn.Linear weights ([out,in]) -> pre-transposed [in,out], scale folded into
    Wq, fused QKV slab, all pre-cast to the MXU compute dtype."""
    wq_t = wq.T / scale                                    # fold 1/sqrt(d_k) into Wq
    wqkv = jnp.concatenate([wq_t, wk.T, wv.T], axis=-1)    # (D, 3D) [in, out]
    wo_t = wo.T                                            # (D, D)  [in, out]
    return wqkv.astype(compute_dtype), wo_t.astype(compute_dtype)


def _pick_block_q(S):
    if S <= 512:
        return S
    for cand in (512, 256, 128, 64, 32, 16, 8):
        if S % cand == 0:
            return cand
    return S  # TODO(synk): pad/mask ragged S instead of falling back to full S.


def _vmem_limit_bytes():
    try:
        cap = int(pltpu.get_tpu_info().vmem_capacity_bytes)
    except Exception:
        cap = 64 * 1024 * 1024  # conservative (v7x per-TC) if the query fails
    # ~85% of physical: ≈54 MiB on v7x (headroom for Mosaic internals),
    # ≈109 MiB on 128 MiB v5e/v6e parts (don't leave half the VMEM unused).
    return int(0.85 * cap)


def multi_head_attention(x, wq, wk, wv, wo, *, n_heads,
                         compute_dtype=jnp.bfloat16, block_q=None):
    B, S, D = x.shape
    assert D % n_heads == 0
    d_k = D // n_heads
    scale = math.sqrt(d_k)

    if block_q is None:
        block_q = _pick_block_q(S)
    assert S % block_q == 0
    num_q = S // block_q

    wqkv, wo_t = _prepare_weights(wq, wk, wv, wo, scale, compute_dtype)
    kernel = partial(_mha_kernel, n_heads=n_heads, d_k=d_k,
                     block_q=block_q, compute_dtype=compute_dtype)

    return pl.pallas_call(
        kernel,
        out_shape=jax.ShapeDtypeStruct((B, S, D), x.dtype),
        grid_spec=pltpu.PrefetchScalarGridSpec(
            num_scalar_prefetch=0,
            grid=(B, num_q),
            in_specs=[
                # x: one block per batch, constant across query tiles (fetched once per b).
                pl.BlockSpec((1, S, D), lambda b, q: (b, 0, 0)),
                # Fused QKV weights: constant index_map -> resident for the whole grid.
                pl.BlockSpec((D, 3 * D), lambda b, q: (0, 0)),
                # Wo.T: constant index_map -> resident for the whole grid.
                pl.BlockSpec((D, D), lambda b, q: (0, 0)),
            ],
            out_specs=pl.BlockSpec((1, block_q, D), lambda b, q: (b, q, 0)),
            scratch_shapes=[pltpu.VMEM((S, 2 * D), compute_dtype)],   # [K | V], all heads
        ),
        compiler_params=pltpu.CompilerParams(
            dimension_semantics=("parallel", "arbitrary"),
            vmem_limit_bytes=_vmem_limit_bytes(),
        ),
    )(x, wqkv, wo_t)


def _reference(x, wq, wk, wv, wo, n_heads):
    # Pure-JAX f32 reference mirroring the PyTorch forward (eval mode, mask=None).
    B, S, D = x.shape
    d_k = D // n_heads
    q = (x @ wq.T).reshape(B, S, n_heads, d_k).transpose(0, 2, 1, 3)
    k = (x @ wk.T).reshape(B, S, n_heads, d_k).transpose(0, 2, 1, 3)
    v = (x @ wv.T).reshape(B, S, n_heads, d_k).transpose(0, 2, 1, 3)
    s = jnp.einsum("bhqd,bhkd->bhqk", q, k) / math.sqrt(d_k)
    p = jax.nn.softmax(s, axis=-1)
    ctx = jnp.einsum("bhqk,bhkd->bhqd", p, v)
    ctx = ctx.transpose(0, 2, 1, 3).reshape(B, S, D)
    return ctx @ wo.T


if __name__ == "__main__":
    B, S, D, H = 2, 8, 32, 4  # batch, seq_len, d_model, n_heads

    key = jax.random.PRNGKey(0)
    kx, kq, kk, kv, ko = jax.random.split(key, 5)
    x = jax.random.normal(kx, (B, S, D), dtype=jnp.float32)
    # nn.Linear(d_model, d_model, bias=False) weights: shape [out, in].
    bound = 1.0 / math.sqrt(D)
    wq = jax.random.uniform(kq, (D, D), jnp.float32, -bound, bound)
    wk = jax.random.uniform(kk, (D, D), jnp.float32, -bound, bound)
    wv = jax.random.uniform(kv, (D, D), jnp.float32, -bound, bound)
    wo = jax.random.uniform(ko, (D, D), jnp.float32, -bound, bound)

    out = multi_head_attention(x, wq, wk, wv, wo, n_heads=H)
    out = jax.block_until_ready(out)

    ref = _reference(x, wq, wk, wv, wo, H)
    assert out.shape == (B, S, D)
    # Tolerance covers bf16 MXU operands (f32 accumulation) and the approximate
    # EUP reciprocal in the softmax normalization; still catches any head /
    # scale / layout bug at these magnitudes. Pass compute_dtype=jnp.float32 for
    # strict f32 parity.
    assert jnp.allclose(out, ref, atol=2e-2, rtol=2e-2), "mismatch vs reference"

    print("KERNEL_OK")
</pallas_src>

<mosaic_0001>
module attributes {stable_mosaic.version = 11 : i64} {
  func.func @_mha_kernel(%arg0: i32, %arg1: i32, %arg2: memref<1x8x32xf32, #tpu.memory_space<vmem>>, %arg3: memref<32x96xbf16, #tpu.memory_space<vmem>>, %arg4: memref<32x32xbf16, #tpu.memory_space<vmem>>, %arg5: memref<1x8x32xf32, #tpu.memory_space<vmem>>, %arg6: memref<8x64xbf16, #tpu.memory_space<vmem>>) attributes {dimension_semantics = [#tpu.dimension_semantics<parallel>, #tpu.dimension_semantics<arbitrary>], iteration_bounds = array<i64: 2, 1>, scalar_prefetch = 0 : i64, scratch_operands = 1 : i64, tpu.core_type = #tpu.core_type<tc>, window_params = [{transform_indices = @transform_0, window_bounds = array<i64: 1, 8, 32>}, {pipeline_mode = #tpu.pipeline_mode<synchronous>, transform_indices = @transform_1, window_bounds = array<i64: 32, 96>}, {pipeline_mode = #tpu.pipeline_mode<synchronous>, transform_indices = @transform_2, window_bounds = array<i64: 32, 32>}, {transform_indices = @transform_3, window_bounds = array<i64: 1, 8, 32>}]} {
    %c0_i32 = arith.constant 0 : i32
    %0 = arith.cmpi eq, %arg1, %c0_i32 : i32
    %1 = arith.extui %0 : i1 to i32
    %c0_i32_0 = arith.constant 0 : i32
    %2 = arith.cmpi ne, %1, %c0_i32_0 : i32
    scf.if %2 {
      %c0_44 = arith.constant 0 : index
      %c0_45 = arith.constant 0 : index
      %c0_46 = arith.constant 0 : index
      %94 = vector.load %arg2[%c0_44, %c0_45, %c0_46] : memref<1x8x32xf32, #tpu.memory_space<vmem>>, vector<1x8x32xf32>
      %95 = vector.shape_cast %94 : vector<1x8x32xf32> to vector<8x32xf32>
      %96 = arith.truncf %95 : vector<8x32xf32> to vector<8x32xbf16>
      %c0_47 = arith.constant 0 : index
      %c32_48 = arith.constant 32 : index
      %97 = vector.load %arg3[%c0_47, %c32_48] : memref<32x96xbf16, #tpu.memory_space<vmem>>, vector<32x64xbf16>
      %cst_49 = arith.constant dense<0.000000e+00> : vector<8x64xf32>
      %98 = tpu.matmul %96, %97, %cst_49 {dimension_numbers = #tpu.dot_dimension_numbers<[1], [0], [0], [1], [0, 0, 1, 1], [], []>} : vector<8x32xbf16>, vector<32x64xbf16>, vector<8x64xf32> -> vector<8x64xf32>
      %99 = arith.truncf %98 : vector<8x64xf32> to vector<8x64xbf16>
      %c0_50 = arith.constant 0 : index
      %c0_51 = arith.constant 0 : index
      %100 = vector.load %arg6[%c0_50, %c0_51] : memref<8x64xbf16, #tpu.memory_space<vmem>>, vector<8x64xbf16>
      tpu.vector_store %arg6[%c0_50, %c0_51], %99 {strides = array<i32>} : memref<8x64xbf16, #tpu.memory_space<vmem>>, vector<8x64xbf16>,
    } else {
    }
    %c8_i32 = arith.constant 8 : i32
    %3 = arith.muli %arg1, %c8_i32 : i32
    %4 = tpu.assume_multiple %3, 8 : i32
    %c0 = arith.constant 0 : index
    %5 = arith.index_cast %4 : i32 to index
    %c0_1 = arith.constant 0 : index
    %6 = vector.load %arg2[%c0, %5, %c0_1] : memref<1x8x32xf32, #tpu.memory_space<vmem>>, vector<1x8x32xf32>
    %7 = vector.shape_cast %6 : vector<1x8x32xf32> to vector<8x32xf32>
    %8 = arith.truncf %7 : vector<8x32xf32> to vector<8x32xbf16>
    %c0_2 = arith.constant 0 : index
    %c0_3 = arith.constant 0 : index
    %9 = vector.load %arg3[%c0_2, %c0_3] : memref<32x96xbf16, #tpu.memory_space<vmem>>, vector<32x32xbf16>
    %cst = arith.constant dense<0.000000e+00> : vector<8x32xf32>
    %10 = tpu.matmul %8, %9, %cst {dimension_numbers = #tpu.dot_dimension_numbers<[1], [0], [0], [1], [0, 0, 1, 1], [], []>} : vector<8x32xbf16>, vector<32x32xbf16>, vector<8x32xf32> -> vector<8x32xf32>
    %11 = arith.truncf %10 : vector<8x32xf32> to vector<8x32xbf16>
    %12 = vector.extract_strided_slice %11 {offsets = [0, 0], sizes = [8, 8], strides = [1, 1]} : vector<8x32xbf16> to vector<8x8xbf16>
    %c0_4 = arith.constant 0 : index
    %c0_5 = arith.constant 0 : index
    %13 = vector.load %arg6[%c0_4, %c0_5] : memref<8x64xbf16, #tpu.memory_space<vmem>>, vector<8x8xbf16>
    %c0_6 = arith.constant 0 : index
    %c32 = arith.constant 32 : index
    %14 = vector.load %arg6[%c0_6, %c32] : memref<8x64xbf16, #tpu.memory_space<vmem>>, vector<8x8xbf16>
    %cst_7 = arith.constant dense<0.000000e+00> : vector<8x8xf32>
    %15 = tpu.matmul %12, %13, %cst_7 {dimension_numbers = #tpu.dot_dimension_numbers<[1], [1], [0], [0], [0, 0, 1, 0], [], []>} : vector<8x8xbf16>, vector<8x8xbf16>, vector<8x8xf32> -> vector<8x8xf32>
    %cst_8 = arith.constant dense<0xFF800000> : vector<8xf32>
    %16 = vector.multi_reduction <maximumf>, %15, %cst_8 [1] : vector<8x8xf32> to vector<8xf32>
    %17 = vector.shape_cast %16 : vector<8xf32> to vector<8x1xf32>
    %18 = vector.broadcast %17 : vector<8x1xf32> to vector<8x8xf32>
    %19 = arith.subf %15, %18 : vector<8x8xf32>
    %20 = math.exp %19 : vector<8x8xf32>
    %cst_9 = arith.constant dense<0.000000e+00> : vector<8xf32>
    %21 = vector.multi_reduction <add>, %20, %cst_9 [1] : vector<8x8xf32> to vector<8xf32>
    %22 = vector.shape_cast %21 : vector<8xf32> to vector<8x1xf32>
    %23 = arith.truncf %20 : vector<8x8xf32> to vector<8x8xbf16>
    %cst_10 = arith.constant dense<0.000000e+00> : vector<8x8xf32>
    %24 = tpu.matmul %23, %14, %cst_10 {dimension_numbers = #tpu.dot_dimension_numbers<[1], [0], [0], [1], [0, 0, 1, 1], [], []>} : vector<8x8xbf16>, vector<8x8xbf16>, vector<8x8xf32> -> vector<8x8xf32>
    %25 = tpu.reciprocal %22 {approx = true} : vector<8x1xf32> -> vector<8x1xf32>
    %26 = vector.broadcast %25 : vector<8x1xf32> to vector<8x8xf32>
    %27 = arith.mulf %24, %26 : vector<8x8xf32>
    %28 = arith.truncf %27 : vector<8x8xf32> to vector<8x8xbf16>
    %c0_11 = arith.constant 0 : index
    %c0_12 = arith.constant 0 : index
    %29 = vector.load %arg4[%c0_11, %c0_12] : memref<32x32xbf16, #tpu.memory_space<vmem>>, vector<8x32xbf16>
    %cst_13 = arith.constant dense<0.000000e+00> : vector<8x32xf32>
    %30 = tpu.matmul %28, %29, %cst_13 {dimension_numbers = #tpu.dot_dimension_numbers<[1], [0], [0], [1], [0, 0, 1, 1], [], []>} : vector<8x8xbf16>, vector<8x32xbf16>, vector<8x32xf32> -> vector<8x32xf32>
    %31 = vector.extract_strided_slice %11 {offsets = [0, 8], sizes = [8, 8], strides = [1, 1]} : vector<8x32xbf16> to vector<8x8xbf16>
    %c0_14 = arith.constant 0 : index
    %c8 = arith.constant 8 : index
    %32 = vector.load %arg6[%c0_14, %c8] : memref<8x64xbf16, #tpu.memory_space<vmem>>, vector<8x8xbf16>
    %c0_15 = arith.constant 0 : index
    %c40 = arith.constant 40 : index
    %33 = vector.load %arg6[%c0_15, %c40] : memref<8x64xbf16, #tpu.memory_space<vmem>>, vector<8x8xbf16>
    %cst_16 = arith.constant dense<0.000000e+00> : vector<8x8xf32>
    %34 = tpu.matmul %31, %32, %cst_16 {dimension_numbers = #tpu.dot_dimension_numbers<[1], [1], [0], [0], [0, 0, 1, 0], [], []>} : vector<8x8xbf16>, vector<8x8xbf16>, vector<8x8xf32> -> vector<8x8xf32>
    %cst_17 = arith.constant dense<0xFF800000> : vector<8xf32>
    %35 = vector.multi_reduction <maximumf>, %34, %cst_17 [1] : vector<8x8xf32> to vector<8xf32>
    %36 = vector.shape_cast %35 : vector<8xf32> to vector<8x1xf32>
    %37 = vector.broadcast %36 : vector<8x1xf32> to vector<8x8xf32>
    %38 = arith.subf %34, %37 : vector<8x8xf32>
    %39 = math.exp %38 : vector<8x8xf32>
    %cst_18 = arith.constant dense<0.000000e+00> : vector<8xf32>
    %40 = vector.multi_reduction <add>, %39, %cst_18 [1] : vector<8x8xf32> to vector<8xf32>
    %41 = vector.shape_cast %40 : vector<8xf32> to vector<8x1xf32>
    %42 = arith.truncf %39 : vector<8x8xf32> to vector<8x8xbf16>
    %cst_19 = arith.constant dense<0.000000e+00> : vector<8x8xf32>
    %43 = tpu.matmul %42, %33, %cst_19 {dimension_numbers = #tpu.dot_dimension_numbers<[1], [0], [0], [1], [0, 0, 1, 1], [], []>} : vector<8x8xbf16>, vector<8x8xbf16>, vector<8x8xf32> -> vector<8x8xf32>
    %44 = tpu.reciprocal %41 {approx = true} : vector<8x1xf32> -> vector<8x1xf32>
    %45 = vector.broadcast %44 : vector<8x1xf32> to vector<8x8xf32>
    %46 = arith.mulf %43, %45 : vector<8x8xf32>
    %47 = arith.truncf %46 : vector<8x8xf32> to vector<8x8xbf16>
    %c8_20 = arith.constant 8 : index
    %c0_21 = arith.constant 0 : index
    %48 = vector.load %arg4[%c8_20, %c0_21] : memref<32x32xbf16, #tpu.memory_space<vmem>>, vector<8x32xbf16>
    %cst_22 = arith.constant dense<0.000000e+00> : vector<8x32xf32>
    %49 = tpu.matmul %47, %48, %cst_22 {dimension_numbers = #tpu.dot_dimension_numbers<[1], [0], [0], [1], [0, 0, 1, 1], [], []>} : vector<8x8xbf16>, vector<8x32xbf16>, vector<8x32xf32> -> vector<8x32xf32>
    %50 = arith.addf %30, %49 : vector<8x32xf32>
    %51 = vector.extract_strided_slice %11 {offsets = [0, 16], sizes = [8, 8], strides = [1, 1]} : vector<8x32xbf16> to vector<8x8xbf16>
    %c0_23 = arith.constant 0 : index
    %c16 = arith.constant 16 : index
    %52 = vector.load %arg6[%c0_23, %c16] : memref<8x64xbf16, #tpu.memory_space<vmem>>, vector<8x8xbf16>
    %c0_24 = arith.constant 0 : index
    %c48 = arith.constant 48 : index
    %53 = vector.load %arg6[%c0_24, %c48] : memref<8x64xbf16, #tpu.memory_space<vmem>>, vector<8x8xbf16>
    %cst_25 = arith.constant dense<0.000000e+00> : vector<8x8xf32>
    %54 = tpu.matmul %51, %52, %cst_25 {dimension_numbers = #tpu.dot_dimension_numbers<[1], [1], [0], [0], [0, 0, 1, 0], [], []>} : vector<8x8xbf16>, vector<8x8xbf16>, vector<8x8xf32> -> vector<8x8xf32>
    %cst_26 = arith.constant dense<0xFF800000> : vector<8xf32>
    %55 = vector.multi_reduction <maximumf>, %54, %cst_26 [1] : vector<8x8xf32> to vector<8xf32>
    %56 = vector.shape_cast %55 : vector<8xf32> to vector<8x1xf32>
    %57 = vector.broadcast %56 : vector<8x1xf32> to vector<8x8xf32>
    %58 = arith.subf %54, %57 : vector<8x8xf32>
    %59 = math.exp %58 : vector<8x8xf32>
    %cst_27 = arith.constant dense<0.000000e+00> : vector<8xf32>
    %60 = vector.multi_reduction <add>, %59, %cst_27 [1] : vector<8x8xf32> to vector<8xf32>
    %61 = vector.shape_cast %60 : vector<8xf32> to vector<8x1xf32>
    %62 = arith.truncf %59 : vector<8x8xf32> to vector<8x8xbf16>
    %cst_28 = arith.constant dense<0.000000e+00> : vector<8x8xf32>
    %63 = tpu.matmul %62, %53, %cst_28 {dimension_numbers = #tpu.dot_dimension_numbers<[1], [0], [0], [1], [0, 0, 1, 1], [], []>} : vector<8x8xbf16>, vector<8x8xbf16>, vector<8x8xf32> -> vector<8x8xf32>
    %64 = tpu.reciprocal %61 {approx = true} : vector<8x1xf32> -> vector<8x1xf32>
    %65 = vector.broadcast %64 : vector<8x1xf32> to vector<8x8xf32>
    %66 = arith.mulf %63, %65 : vector<8x8xf32>
    %67 = arith.truncf %66 : vector<8x8xf32> to vector<8x8xbf16>
    %c16_29 = arith.constant 16 : index
    %c0_30 = arith.constant 0 : index
    %68 = vector.load %arg4[%c16_29, %c0_30] : memref<32x32xbf16, #tpu.memory_space<vmem>>, vector<8x32xbf16>
    %cst_31 = arith.constant dense<0.000000e+00> : vector<8x32xf32>
    %69 = tpu.matmul %67, %68, %cst_31 {dimension_numbers = #tpu.dot_dimension_numbers<[1], [0], [0], [1], [0, 0, 1, 1], [], []>} : vector<8x8xbf16>, vector<8x32xbf16>, vector<8x32xf32> -> vector<8x32xf32>
    %70 = arith.addf %50, %69 : vector<8x32xf32>
    %71 = vector.extract_strided_slice %11 {offsets = [0, 24], sizes = [8, 8], strides = [1, 1]} : vector<8x32xbf16> to vector<8x8xbf16>
    %c0_32 = arith.constant 0 : index
    %c24 = arith.constant 24 : index
    %72 = vector.load %arg6[%c0_32, %c24] : memref<8x64xbf16, #tpu.memory_space<vmem>>, vector<8x8xbf16>
    %c0_33 = arith.constant 0 : index
    %c56 = arith.constant 56 : index
    %73 = vector.load %arg6[%c0_33, %c56] : memref<8x64xbf16, #tpu.memory_space<vmem>>, vector<8x8xbf16>
    %cst_34 = arith.constant dense<0.000000e+00> : vector<8x8xf32>
    %74 = tpu.matmul %71, %72, %cst_34 {dimension_numbers = #tpu.dot_dimension_numbers<[1], [1], [0], [0], [0, 0, 1, 0], [], []>} : vector<8x8xbf16>, vector<8x8xbf16>, vector<8x8xf32> -> vector<8x8xf32>
    %cst_35 = arith.constant dense<0xFF800000> : vector<8xf32>
    %75 = vector.multi_reduction <maximumf>, %74, %cst_35 [1] : vector<8x8xf32> to vector<8xf32>
    %76 = vector.shape_cast %75 : vector<8xf32> to vector<8x1xf32>
    %77 = vector.broadcast %76 : vector<8x1xf32> to vector<8x8xf32>
    %78 = arith.subf %74, %77 : vector<8x8xf32>
    %79 = math.exp %78 : vector<8x8xf32>
    %cst_36 = arith.constant dense<0.000000e+00> : vector<8xf32>
    %80 = vector.multi_reduction <add>, %79, %cst_36 [1] : vector<8x8xf32> to vector<8xf32>
    %81 = vector.shape_cast %80 : vector<8xf32> to vector<8x1xf32>
    %82 = arith.truncf %79 : vector<8x8xf32> to vector<8x8xbf16>
    %cst_37 = arith.constant dense<0.000000e+00> : vector<8x8xf32>
    %83 = tpu.matmul %82, %73, %cst_37 {dimension_numbers = #tpu.dot_dimension_numbers<[1], [0], [0], [1], [0, 0, 1, 1], [], []>} : vector<8x8xbf16>, vector<8x8xbf16>, vector<8x8xf32> -> vector<8x8xf32>
    %84 = tpu.reciprocal %81 {approx = true} : vector<8x1xf32> -> vector<8x1xf32>
    %85 = vector.broadcast %84 : vector<8x1xf32> to vector<8x8xf32>
    %86 = arith.mulf %83, %85 : vector<8x8xf32>
    %87 = arith.truncf %86 : vector<8x8xf32> to vector<8x8xbf16>
    %c24_38 = arith.constant 24 : index
    %c0_39 = arith.constant 0 : index
    %88 = vector.load %arg4[%c24_38, %c0_39] : memref<32x32xbf16, #tpu.memory_space<vmem>>, vector<8x32xbf16>
    %cst_40 = arith.constant dense<0.000000e+00> : vector<8x32xf32>
    %89 = tpu.matmul %87, %88, %cst_40 {dimension_numbers = #tpu.dot_dimension_numbers<[1], [0], [0], [1], [0, 0, 1, 1], [], []>} : vector<8x8xbf16>, vector<8x32xbf16>, vector<8x32xf32> -> vector<8x32xf32>
    %90 = arith.addf %70, %89 : vector<8x32xf32>
    %c0_41 = arith.constant 0 : index
    %c0_42 = arith.constant 0 : index
    %c0_43 = arith.constant 0 : index
    %91 = vector.load %arg5[%c0_41, %c0_42, %c0_43] : memref<1x8x32xf32, #tpu.memory_space<vmem>>, vector<1x8x32xf32>
    %92 = vector.shape_cast %91 : vector<1x8x32xf32> to vector<8x32xf32>
    %93 = vector.shape_cast %90 : vector<8x32xf32> to vector<1x8x32xf32>
    tpu.vector_store %arg5[%c0_41, %c0_42, %c0_43], %93 {strides = array<i32>} : memref<1x8x32xf32, #tpu.memory_space<vmem>>, vector<1x8x32xf32>,
    return
  }
  func.func @transform_0(%arg0: i32, %arg1: i32) -> (i32, i32, i32) {
    %c0_i32 = arith.constant 0 : i32
    %c0_i32_0 = arith.constant 0 : i32
    %c0_i32_1 = arith.constant 0 : i32
    return %arg0, %c0_i32, %c0_i32_0 : i32, i32, i32
  }
  func.func @transform_1(%arg0: i32, %arg1: i32) -> (i32, i32) {
    %c0_i32 = arith.constant 0 : i32
    %c0_i32_0 = arith.constant 0 : i32
    %c0_i32_1 = arith.constant 0 : i32
    return %c0_i32, %c0_i32_0 : i32, i32
  }
  func.func @transform_2(%arg0: i32, %arg1: i32) -> (i32, i32) {
    %c0_i32 = arith.constant 0 : i32
    %c0_i32_0 = arith.constant 0 : i32
    %c0_i32_1 = arith.constant 0 : i32
    return %c0_i32, %c0_i32_0 : i32, i32
  }
  func.func @transform_3(%arg0: i32, %arg1: i32) -> (i32, i32, i32) {
    %c0_i32 = arith.constant 0 : i32
    %c0_i32_0 = arith.constant 0 : i32
    return %arg0, %arg1, %c0_i32 : i32, i32, i32
  }
}

</mosaic_0001>

<llo_original>
// kernel: tpu_custom_call.1
$region0: #{tpu_custom_call.1}
  #allocation0 [shape = 'u32[]', space=smem, size = 0x4, offset = 0x4, fixed_abs, tag = 'smem constant byte address 0x4 - core index']
  #allocation1 [shape = 'u32[72,128]{1,0:T(1,128)}', space=vmem, size = 0x9000, scoped, tag = 'internal scratch']
  #allocation2 [shape = 'bf16[8,64]{1,0:T(8,128)(2,1)}', space=vmem, size = 0x800, scoped, tag = 'scratch operand']
  %s0 = inlined_call_operand.hbm [shape: f32[2,8,32], index: 0, kind: input, shape index: {}]
  %s1 = inlined_call_operand.hbm [shape: bf16[32,96], index: 1, kind: input, shape index: {}]
  %s2 = inlined_call_operand.hbm [shape: bf16[32,32], index: 2, kind: input, shape index: {}]
  %s3 = inlined_call_operand.hbm [shape: f32[2,8,32], index: 3, kind: output, shape index: {}]
  %s4 = sld [smem:[#allocation0]]
  $region61: #{tpu_custom_call.1} parent=0
    _
  %s6 = ssub.s32 1, %s4
  %s7 = scalar_select 0, %s6, %s4
  $region1: #{tpu_custom_call.1} parent=0
    #allocation3 [shape = 'u8[8192]{0}', space=vmem, size = 0x2000, scoped, tag = 'input window, operand 0']
    #allocation4 [shape = 's32[2]{0}', space=sflag, size = 0x8, scoped, tag = 'scoped memory for tpu_custom_call.1']
    #allocation5 [shape = 's32[2]{0}', space=sflag, size = 0x8, scoped, tag = 'scoped memory for tpu_custom_call.1']
    #allocation6 [shape = 'u8[8192]{0}', space=vmem, size = 0x2000, scoped, tag = 'input window, operand 1, single buffered']
    #allocation7 [shape = 's32[1]{0}', space=sflag, size = 0x4, scoped, tag = 'scoped memory for tpu_custom_call.1']
    #allocation8 [shape = 'u8[8192]{0}', space=vmem, size = 0x2000, scoped, tag = 'input window, operand 2, single buffered']
    #allocation9 [shape = 'u8[8192]{0}', space=vmem, size = 0x2000, scoped, tag = 'output window, operand 0']
    %8 = vsyncpa [#allocation4], 0
    %s9 = scalar_lea.sflag [#allocation4], 1
    %10 = vsyncpa %s9, 0
    %11 = vsyncpa [#allocation7], 0
    %12 = vsyncpa [#allocation5], 0
    %s13 = scalar_lea.sflag [#allocation5], 1
    %14 = vsyncpa %s13, 0
    loop: start=0, step=1, limit=4
    $region2: #{tpu_custom_call.1} parent=1 // loop_pre_header
      _
    $region3: #{tpu_custom_call.1} parent=1 // loop_header
      %s16 = sphi 0, %s20
      %p17 = scmp.ge.s32.totalorder %s16, 4
      %s23 = sphi 0, %s35
      %s24 = sphi 0, %s31
      %s25 = sphi 0, %s23
      %s26 = sphi 0, %s24
      %s27 = sphi 0, %s25
      %s28 = sphi 0, %s26
      %s38 = sphi 0, %s40
      %s41 = sphi 0, %s38
      %s42 = sphi 0, %s41
      %s58 = sphi 0, %s42
      %s62 = sphi 0, %s62
      %s64 = sphi 0, %s62
      %s65 = sphi 0, %s64
      %s79 = sphi 0, %s65
      %s83 = sphi 0, %s83
      %s85 = sphi 0, %s83
      %s86 = sphi 0, %s85
      %s100 = sphi 0, %s86
      %s108 = sphi 0, %s110
      %s111 = sphi 0, %s108
      %s112 = sphi 0, %s111
      %s128 = sphi 0, %s112
    $region4: #{tpu_custom_call.1} parent=1 // loop_header_branch
      %19 = sbr.rel (%p17) target = $region8
    $region5: #{tpu_custom_call.1} parent=1 // loop_body
      %s21 = ssub.s32 %s16, 1
      %s22 = ssub.s32 %s16, 2
      %s29 = sadd.s32 1, %s24
      %p30 = scmp.ge.s32.totalorder %s29, 1
      %s31 = scalar_select %p30, 0, %s29
      %s32 = sadd.s32 1, %s23
      %s33 = scalar_select %p30, %s32, %s23
      %p34 = scmp.ge.s32.totalorder %s33, 2
      %s35 = scalar_select %p34, 0, %s33
      %s36 = ssub.s32 %s23, %s35
      %p37 = scmp.eq.s32.totalorder %s36, 0
      %s39 = sadd.s32 %s38, 1
      %s40 = scalar_select %p37, %s38, %s39
      %p43 = pneg %p37
      %p44 = scmp.eq.s32.totalorder %s16, 1
      %p45 = por %p43, %p44
      %p46 = scmp.ne.s32.totalorder %s38, %s41
      %p47 = scmp.eq.s32.totalorder %s16, 0
      %p48 = por %p46, %p47
      %p49 = scmp.ne.s32.totalorder %s38, %s41
      %p50 = scmp.eq.s32.totalorder %s21, 1
      %p51 = por %p49, %p50
      %p52 = scmp.ne.s32.totalorder %s41, %s42
      %p53 = scmp.eq.s32.totalorder %s21, 0
      %p54 = por %p52, %p53
      %p55 = scmp.ne.s32.totalorder %s41, %s42
      %p56 = scmp.eq.s32.totalorder %s22, 1
      %p57 = por %p55, %p56
      %p59 = scmp.ne.s32.totalorder %s42, %s58
      %p60 = scmp.eq.s32.totalorder %s22, 0
      %p61 = por %p59, %p60
      %s63 = sadd.s32 %s62, 1
      %p66 = scmp.eq.s32.totalorder %s16, 1
      %p67 = scmp.ne.s32.totalorder %s62, %s64
      %p68 = scmp.eq.s32.totalorder %s16, 0
      %p69 = por %p67, %p68
      %p70 = scmp.ne.s32.totalorder %s62, %s64
      %p71 = scmp.eq.s32.totalorder %s21, 1
      %p72 = por %p70, %p71
      %p73 = scmp.ne.s32.totalorder %s64, %s65
      %p74 = scmp.eq.s32.totalorder %s21, 0
      %p75 = por %p73, %p74
      %p76 = scmp.ne.s32.totalorder %s64, %s65
      %p77 = scmp.eq.s32.totalorder %s22, 1
      %p78 = por %p76, %p77
      %p80 = scmp.ne.s32.totalorder %s65, %s79
      %p81 = scmp.eq.s32.totalorder %s22, 0
      %p82 = por %p80, %p81
      %s84 = sadd.s32 %s83, 1
      %p87 = scmp.eq.s32.totalorder %s16, 1
      %p88 = scmp.ne.s32.totalorder %s83, %s85
      %p89 = scmp.eq.s32.totalorder %s16, 0
      %p90 = por %p88, %p89
      %p91 = scmp.ne.s32.totalorder %s83, %s85
      %p92 = scmp.eq.s32.totalorder %s21, 1
      %p93 = por %p91, %p92
      %p94 = scmp.ne.s32.totalorder %s85, %s86
      %p95 = scmp.eq.s32.totalorder %s21, 0
      %p96 = por %p94, %p95
      %p97 = scmp.ne.s32.totalorder %s85, %s86
      %p98 = scmp.eq.s32.totalorder %s22, 1
      %p99 = por %p97, %p98
      %p101 = scmp.ne.s32.totalorder %s86, %s100
      %p102 = scmp.eq.s32.totalorder %s22, 0
      %p103 = por %p101, %p102
      %s104 = ssub.s32 %s23, %s35
      %s105 = ssub.s32 %s24, %s31
      %s106 = sor.u32 %s104, %s105
      %p107 = scmp.eq.s32.totalorder %s106, 0
      %s109 = sadd.s32 %s108, 1
      %s110 = scalar_select %p107, %s108, %s109
      %p113 = pneg %p107
      %p114 = scmp.eq.s32.totalorder %s16, 1
      %p115 = por %p113, %p114
      %p116 = scmp.ne.s32.totalorder %s108, %s111
      %p117 = scmp.eq.s32.totalorder %s16, 0
      %p118 = por %p116, %p117
      %p119 = scmp.ne.s32.totalorder %s108, %s111
      %p120 = scmp.eq.s32.totalorder %s21, 1
      %p121 = por %p119, %p120
      %p122 = scmp.ne.s32.totalorder %s111, %s112
      %p123 = scmp.eq.s32.totalorder %s21, 0
      %p124 = por %p122, %p123
      %p125 = scmp.ne.s32.totalorder %s111, %s112
      %p126 = scmp.eq.s32.totalorder %s22, 1
      %p127 = por %p125, %p126
      %p129 = scmp.ne.s32.totalorder %s112, %s128
      %p130 = scmp.eq.s32.totalorder %s22, 0
      %p131 = por %p129, %p130
      %p132 = scmp.le.s32.totalorder 1, %s16
      %p133 = scmp.lt.s32.totalorder %s16, 3
      %p134 = pnand %p132, %p133
      %p135 = pneg %p134
      // Predicated region
      $region9: #{tpu_custom_call.1} parent=5 // pred_check
        _
      $region10: #{tpu_custom_call.1} parent=5 // pred_check_branch
        %137 = sbr.rel (%p134) target = $region12
      $region11: #{tpu_custom_call.1} parent=5 // pred_region
        %s138 = ssub.s32 %s16, 1
        // Predicated region
        $region13: #{tpu_custom_call.1} parent=11 // pred_check
          %p139 = pneg %p75
        $region14: #{tpu_custom_call.1} parent=11 // pred_check_branch
          %141 = sbr.rel (%p139) target = $region16
        $region15: #{tpu_custom_call.1} parent=11 // pred_region
          %143 = vsyncadd [#allocation7], 0
          %s144 = sshll.u32 %s1, 4
          %s145 = int_to_ptr.hbm [resolvable:$true] %s144
          %s146 = sshll.u32 [#allocation6], 4
          %s147 = int_to_ptr.vmem [resolvable:$true] %s146
          %152 = dma.hbm_to_vmem [thread:$0]  %s145, 256, %s147, [#allocation7], 64, 64, 4
        $region16: #{tpu_custom_call.1} parent=11 // pred_fallthru
          _
        // Predicated region
        $region17: #{tpu_custom_call.1} parent=11 // pred_check
          %p153 = pneg %p96
        $region18: #{tpu_custom_call.1} parent=11 // pred_check_branch
          %155 = sbr.rel (%p153) target = $region20
        $region19: #{tpu_custom_call.1} parent=11 // pred_region
          %157 = vsyncadd [#allocation7], 0
          %s158 = sshll.u32 %s2, 4
          %s159 = int_to_ptr.hbm [resolvable:$true] %s158
          %s160 = sshll.u32 [#allocation8], 4
          %s161 = int_to_ptr.vmem [resolvable:$true] %s160
          %166 = dma.hbm_to_vmem [thread:$0]  %s159, 256, %s161, [#allocation7], 64, 64, 4
        $region20: #{tpu_custom_call.1} parent=11 // pred_fallthru
          _
      $region12: #{tpu_custom_call.1} parent=5 // pred_fallthru
        _
      %p167 = scmp.lt.s32.totalorder %s16, 2
      // Predicated region
      $region21: #{tpu_custom_call.1} parent=5 // pred_check
        %p168 = pneg %p167
      $region22: #{tpu_custom_call.1} parent=5 // pred_check_branch
        %170 = sbr.rel (%p168) target = $region24
      $region23: #{tpu_custom_call.1} parent=5 // pred_region
        // Predicated region
        $region25: #{tpu_custom_call.1} parent=23 // pred_check
          %p171 = pneg %p48
        $region26: #{tpu_custom_call.1} parent=23 // pred_check_branch
          %173 = sbr.rel (%p171) target = $region28
        $region27: #{tpu_custom_call.1} parent=23 // pred_region
          %s174 = sand.u32 %s38, 1
          %s175 = scalar_lea.sflag [#allocation4], %s174
          %s176 = sand.u32 %s38, 1
          %s177 = smul.addr %s176, 8
          %s178 = scalar_lea.vmem [#allocation3], %s177
          %180 = vsyncadd %s175, 0
          %s181 = smul.addr %s23, 8
          %s182 = scalar_lea.hbm %s0, %s181
          %s184 = sshll.u32 %s182, 4
          %s185 = int_to_ptr.hbm [resolvable:$true] %s184
          %s186 = sshll.u32 %s178, 4
          %s187 = int_to_ptr.vmem [resolvable:$true] %s186
          %189 = dma.hbm_to_vmem [thread:$0]  %s185, 128, %s187, %s175
        $region28: #{tpu_custom_call.1} parent=23 // pred_fallthru
          _
      $region24: #{tpu_custom_call.1} parent=5 // pred_fallthru
        _
      %p190 = scmp.le.s32.totalorder 1, %s16
      %p191 = scmp.lt.s32.totalorder %s16, 3
      %p192 = pnand %p190, %p191
      %p193 = pneg %p192
      // Predicated region
      $region29: #{tpu_custom_call.1} parent=5 // pred_check
        _
      $region30: #{tpu_custom_call.1} parent=5 // pred_check_branch
        %195 = sbr.rel (%p192) target = $region32
      $region31: #{tpu_custom_call.1} parent=5 // pred_region
        %s196 = ssub.s32 %s16, 1
        %s197 = sand.u32 %s41, 1
        %s198 = scalar_lea.sflag [#allocation4], %s197
        %s199 = sand.u32 %s41, 1
        %s200 = smul.addr %s199, 8
        %s201 = scalar_lea.vmem [#allocation3], %s200
        // Predicated region
        $region33: #{tpu_custom_call.1} parent=31 // pred_check
          %p202 = pneg %p54
        $region34: #{tpu_custom_call.1} parent=31 // pred_check_branch
          %204 = sbr.rel (%p202) target = $region36
        $region35: #{tpu_custom_call.1} parent=31 // pred_region
          %206 = dma.done %s198, 128
        $region36: #{tpu_custom_call.1} parent=31 // pred_fallthru
          _
        // Predicated region
        $region37: #{tpu_custom_call.1} parent=31 // pred_check
          %p207 = pneg %p75
        $region38: #{tpu_custom_call.1} parent=31 // pred_check_branch
          %209 = sbr.rel (%p207) target = $region40
        $region39: #{tpu_custom_call.1} parent=31 // pred_region
          %211 = dma.done [#allocation7], 256
        $region40: #{tpu_custom_call.1} parent=31 // pred_fallthru
          _
        // Predicated region
        $region41: #{tpu_custom_call.1} parent=31 // pred_check
          %p212 = pneg %p96
        $region42: #{tpu_custom_call.1} parent=31 // pred_check_branch
          %214 = sbr.rel (%p212) target = $region44
        $region43: #{tpu_custom_call.1} parent=31 // pred_region
          %216 = dma.done [#allocation7], 256
        $region44: #{tpu_custom_call.1} parent=31 // pred_fallthru
          _
        %s217 = sand.u32 %s41, 1
        %s218 = scalar_lea.sflag [#allocation4], %s217
        %s219 = sand.u32 %s41, 1
        %s220 = smul.addr %s219, 8
        %s221 = scalar_lea.vmem [#allocation3], %s220
        %p222 = pneg %p54
        %p223 = pneg %p51
        %p224 = pneg %p75
        %p225 = pneg %p72
        %p226 = pneg %p96
        %p227 = pneg %p93
        %p228 = pneg %p124
        %p229 = pneg %p121
        %s230 = sand.u32 %s111, 1
        %s231 = scalar_lea.sflag [#allocation5], %s230
        %s232 = sand.u32 %s111, 1
        %s233 = smul.addr %s232, 8
        %s234 = scalar_lea.vmem [#allocation9], %s233
        %p236 = scmp.eq.s32.totalorder %s26, 0
        // Predicated region
        $region45: #{tpu_custom_call.1} parent=31 // pred_check
          %p237 = pneg %p236
        $region46: #{tpu_custom_call.1} parent=31 // pred_check_branch
          %239 = sbr.rel (%p237) target = $region48
        $region47: #{tpu_custom_call.1} parent=31 // pred_region
          %v240 = vld [vmem:[%s201] sm:$0xff]
          %v241 = vpack.c.bf16 %v240, %v240
          %v242 = vld [vmem:[#allocation6] sm:$0xf]
          %v243 = vld [vmem:[#allocation6 + $0x4] sm:$0xf]
          %v244 = vld [vmem:[#allocation6 + $0x8] sm:$0xf]
          %v245 = vld [vmem:[#allocation6 + $0xc] sm:$0xf]
          %v250 = vunpack.c.l.b16 %v242
          %v251 = vunpack.c.l.b16 %v243
          %v252 = vunpack.c.l.b16 %v244
          %v253 = vunpack.c.l.b16 %v245
          %v254 = vpack.c.b16 %v251, %v250
          %v255 = vpack.c.b16 %v253, %v252
          %256 = vrot.lane.b32.xlu0 %v254, 96
          %v257 = vpop.permute.xlu0 %256
          %258 = vrot.lane.b32.xlu0 %v255, 96
          %v259 = vpop.permute.xlu0 %258
          %vm262 = vcmask 261120
          %v264 = vsel %vm262, %v241, 0
          %266 = vmatpush.bf16.msra.mxu0 0
          %267 = vmatpush.bf16.msra.mxu0 0
          %268 = vmatpush.bf16.msra.mxu0 0
          %269 = vmatpush.bf16.msra.mxu0 0
          %270 = vmatpush.bf16.msra.mxu0 0
          %271 = vmatpush.bf16.msra.mxu0 0
          %272 = vmatpush.bf16.msra.mxu0 %v259
          %273 = vmatpush.bf16.msra.mxu0 %v257
          %274 = vmatmul.bf16.gmra.mxu0 %v264
          %v275 = vpop.f32.mrf.mxu0
          %v276 = vadd.f32 0.0, %v275
          %v277 = vpop.f32.mrf.mxu0
          %278 = vdwg.mxu0
          %v279 = vpack.c.bf16 %v276, %v276
          %vm280 = vcmask 519168
          %281 = vst.msk [vmem:[#allocation2] sm:$0xf] %vm280, %v279
        $region48: #{tpu_custom_call.1} parent=31 // pred_fallthru
          _
        %s282 = smul.u32 %s26, 8
        %s283 = scalar_lea.vmem %s201, %s282 [#allocation3]
        %v284 = vld [vmem:[%s283] sm:$0xff]
        %v285 = vpack.c.bf16 %v284, %v284
        %v286 = vld [vmem:[#allocation6] sm:$0xf]
        %v287 = vld [vmem:[#allocation6 + $0x4] sm:$0xf]
        %v288 = vld [vmem:[#allocation6 + $0x8] sm:$0xf]
        %v289 = vld [vmem:[#allocation6 + $0xc] sm:$0xf]
        %v294 = vunpack.c.l.b16 %v286
        %v295 = vunpack.c.l.b16 %v287
        %v296 = vunpack.c.l.b16 %v288
        %v297 = vunpack.c.l.b16 %v289
        %v298 = vpack.c.b16 %v295, %v294
        %v299 = vpack.c.b16 %v297, %v296
        %vm302 = vcmask 261120
        %v304 = vsel %vm302, %v285, 0
        %306 = vmatpush.bf16.msra.mxu0 0
        %307 = vmatpush.bf16.msra.mxu0 0
        %308 = vmatpush.bf16.msra.mxu0 0
        %309 = vmatpush.bf16.msra.mxu0 0
        %310 = vmatpush.bf16.msra.mxu0 0
        %311 = vmatpush.bf16.msra.mxu0 0
        %312 = vmatpush.bf16.msra.mxu0 %v299
        %313 = vmatpush.bf16.msra.mxu0 %v298
        %314 = vmatmul.bf16.gmra.mxu0 %v304
        %v315 = vpop.f32.mrf.mxu0
        %v316 = vadd.f32 0.0, %v315
        %v317 = vpop.f32.mrf.mxu0
        %318 = vdwg.mxu0
        %v319 = vpack.c.bf16 %v316, %v316
        %v320 = vld [vmem:[#allocation2] sm:$0xf]
        %vm321 = vcmask 64512
        %v323 = vsel %vm321, %v319, 0
        %v326 = vsel %vm321, %v320, 0
        %328 = vmatpush.bf16.xpose.msra.mxu0 0
        %329 = vmatpush.bf16.xpose.msra.mxu0 0
        %330 = vmatpush.bf16.xpose.msra.mxu0 0
        %331 = vmatpush.bf16.xpose.msra.mxu0 0
        %332 = vmatpush.bf16.xpose.msra.mxu0 0
        %333 = vmatpush.bf16.xpose.msra.mxu0 0
        %334 = vmatpush.bf16.xpose.msra.mxu0 0
        %335 = vmatpush.bf16.xpose.msra.mxu0 %v326
        %336 = vmatmul.bf16.gmra.mxu0 %v323
        %v337 = vpop.f32.mrf.mxu0
        %v338 = vadd.f32 0.0, %v337
        %v339 = vpop.f32.mrf.mxu0
        %340 = vdwg.mxu0
        %v341 = vsel %vm321, %v338, -inf
        %342 = vmax.xlane.f32.xlu0 %v341
        %v343 = vpop.xlane.xlu0 %342
        %v344 = vsub.f32 %v338, %v343
        %v345 = vmul.f32 %v344, 1.442695
        %v346 = vpow.pop %v345
        %v347 = vsel %vm321, %v346, 0.0
        %348 = vadd.xlane.f32.xlu0 %v347
        %v349 = vpop.xlane.xlu0 %348
        %v350 = vpack.c.bf16 %v346, %v346
        %v352 = vunpack.c.l.b16 %v320
        %v353 = vpack.c.b16 %v352, %v352
        %354 = vrot.lane.b32.xlu0 %v353, 96
        %v355 = vpop.permute.xlu0 %354
        %v357 = vsel %vm321, %v350, 0
        %vm359 = vcmask 1043456
        %v361 = vsel %vm359, %v355, 0
        %363 = vmatpush.bf16.msra.mxu0 0
        %364 = vmatpush.bf16.msra.mxu0 0
        %365 = vmatpush.bf16.msra.mxu0 0
        %366 = vmatpush.bf16.msra.mxu0 0
        %367 = vmatpush.bf16.msra.mxu0 0
        %368 = vmatpush.bf16.msra.mxu0 0
        %369 = vmatpush.bf16.msra.mxu0 0
        %370 = vmatpush.bf16.msra.mxu0 %v361
        %371 = vmatmul.bf16.gmra.mxu0 %v357
        %v372 = vpop.f32.mrf.mxu0
        %v373 = vadd.f32 0.0, %v372
        %v374 = vpop.f32.mrf.mxu0
        %375 = vdwg.mxu0
        %v376 = vrcp.pop %v349
        %v377 = vmul.f32 %v373, %v376
        %v378 = vpack.c.bf16 %v377, %v377
        %v379 = vld [vmem:[#allocation8] sm:$0xf]
        %v381 = vunpack.c.l.b16 %v319
        %v382 = vpack.c.b16 %v381, %v381
        %383 = vrot.lane.b32.xlu0 %v382, 120
        %v384 = vpop.permute.xlu0 %383
        %385 = vrot.lane.b32.xlu0 %v353, 120
        %v386 = vpop.permute.xlu0 %385
        %v388 = vsel %vm321, %v384, 0
        %v391 = vsel %vm321, %v386, 0
        %393 = vmatpush.bf16.xpose.msra.mxu0 0
        %394 = vmatpush.bf16.xpose.msra.mxu0 0
        %395 = vmatpush.bf16.xpose.msra.mxu0 0
        %396 = vmatpush.bf16.xpose.msra.mxu0 0
        %397 = vmatpush.bf16.xpose.msra.mxu0 0
        %398 = vmatpush.bf16.xpose.msra.mxu0 0
        %399 = vmatpush.bf16.xpose.msra.mxu0 0
        %400 = vmatpush.bf16.xpose.msra.mxu0 %v391
        %401 = vmatmul.bf16.gmra.mxu0 %v388
        %v402 = vpop.f32.mrf.mxu0
        %v403 = vadd.f32 0.0, %v402
        %v404 = vpop.f32.mrf.mxu0
        %405 = vdwg.mxu0
        %v406 = vsel %vm321, %v403, -inf
        %407 = vmax.xlane.f32.xlu0 %v406
        %v408 = vpop.xlane.xlu0 %407
        %v409 = vsub.f32 %v403, %v408
        %v410 = vmul.f32 %v409, 1.442695
        %v411 = vpow.pop %v410
        %v412 = vsel %vm321, %v411, 0.0
        %413 = vadd.xlane.f32.xlu0 %v412
        %v414 = vpop.xlane.xlu0 %413
        %v415 = vpack.c.bf16 %v411, %v411
        %416 = vrot.lane.b32.xlu0 %v353, 88
        %v417 = vpop.permute.xlu0 %416
        %v419 = vsel %vm321, %v415, 0
        %v422 = vsel %vm359, %v417, 0
        %424 = vmatpush.bf16.msra.mxu0 0
        %425 = vmatpush.bf16.msra.mxu0 0
        %426 = vmatpush.bf16.msra.mxu0 0
        %427 = vmatpush.bf16.msra.mxu0 0
        %428 = vmatpush.bf16.msra.mxu0 0
        %429 = vmatpush.bf16.msra.mxu0 0
        %430 = vmatpush.bf16.msra.mxu0 0
        %431 = vmatpush.bf16.msra.mxu0 %v422
        %432 = vmatmul.bf16.gmra.mxu0 %v419
        %v433 = vpop.f32.mrf.mxu0
        %v434 = vadd.f32 0.0, %v433
        %v435 = vpop.f32.mrf.mxu0
        %436 = vdwg.mxu0
        %v437 = vrcp.pop %v414
        %v438 = vmul.f32 %v434, %v437
        %v439 = vpack.c.bf16 %v438, %v438
        %v440 = vld [vmem:[#allocation8 + $0x4] sm:$0xf]
        %v442 = vsel %vm321, %v439, 0
        %v445 = vsel %vm359, %v440, 0
        %447 = vmatpush.bf16.msra.mxu0 0
        %448 = vmatpush.bf16.msra.mxu0 0
        %449 = vmatpush.bf16.msra.mxu0 0
        %450 = vmatpush.bf16.msra.mxu0 0
        %451 = vmatpush.bf16.msra.mxu0 0
        %452 = vmatpush.bf16.msra.mxu0 0
        %453 = vmatpush.bf16.msra.mxu0 0
        %454 = vmatpush.bf16.msra.mxu0 %v445
        %455 = vmatmul.bf16.gmra.mxu0 %v442
        %v456 = vpop.f32.mrf.mxu0
        %v457 = vadd.f32 0.0, %v456
        %v458 = vpop.f32.mrf.mxu0
        %459 = vdwg.mxu0
        %v461 = vsel %vm321, %v378, 0
        %v464 = vsel %vm359, %v379, 0
        %466 = vmatpush.bf16.msra.mxu0 0
        %467 = vmatpush.bf16.msra.mxu0 0
        %468 = vmatpush.bf16.msra.mxu0 0
        %469 = vmatpush.bf16.msra.mxu0 0
        %470 = vmatpush.bf16.msra.mxu0 0
        %471 = vmatpush.bf16.msra.mxu0 0
        %472 = vmatpush.bf16.msra.mxu0 0
        %473 = vmatpush.bf16.msra.mxu0 %v464
        %474 = vmatmul.bf16.gmra.mxu0 %v461
        %v475 = vpop.f32.mrf.mxu0
        %v476 = vadd.f32 %v457, %v475
        %v477 = vpop.f32.mrf.mxu0
        %478 = vdwg.mxu0
        %479 = vrot.lane.b32.xlu0 %v382, 112
        %v480 = vpop.permute.xlu0 %479
        %481 = vrot.lane.b32.xlu0 %v353, 112
        %v482 = vpop.permute.xlu0 %481
        %v484 = vsel %vm321, %v480, 0
        %v487 = vsel %vm321, %v482, 0
        %489 = vmatpush.bf16.xpose.msra.mxu0 0
        %490 = vmatpush.bf16.xpose.msra.mxu0 0
        %491 = vmatpush.bf16.xpose.msra.mxu0 0
        %492 = vmatpush.bf16.xpose.msra.mxu0 0
        %493 = vmatpush.bf16.xpose.msra.mxu0 0
        %494 = vmatpush.bf16.xpose.msra.mxu0 0
        %495 = vmatpush.bf16.xpose.msra.mxu0 0
        %496 = vmatpush.bf16.xpose.msra.mxu0 %v487
        %497 = vmatmul.bf16.gmra.mxu0 %v484
        %v498 = vpop.f32.mrf.mxu0
        %v499 = vadd.f32 0.0, %v498
        %v500 = vpop.f32.mrf.mxu0
        %501 = vdwg.mxu0
        %v502 = vsel %vm321, %v499, -inf
        %503 = vmax.xlane.f32.xlu0 %v502
        %v504 = vpop.xlane.xlu0 %503
        %v505 = vsub.f32 %v499, %v504
        %v506 = vmul.f32 %v505, 1.442695
        %v507 = vpow.pop %v506
        %v508 = vsel %vm321, %v507, 0.0
        %509 = vadd.xlane.f32.xlu0 %v508
        %v510 = vpop.xlane.xlu0 %509
        %v511 = vpack.c.bf16 %v507, %v507
        %512 = vrot.lane.b32.xlu0 %v353, 80
        %v513 = vpop.permute.xlu0 %512
        %v515 = vsel %vm321, %v511, 0
        %v518 = vsel %vm359, %v513, 0
        %520 = vmatpush.bf16.msra.mxu0 0
        %521 = vmatpush.bf16.msra.mxu0 0
        %522 = vmatpush.bf16.msra.mxu0 0
        %523 = vmatpush.bf16.msra.mxu0 0
        %524 = vmatpush.bf16.msra.mxu0 0
        %525 = vmatpush.bf16.msra.mxu0 0
        %526 = vmatpush.bf16.msra.mxu0 0
        %527 = vmatpush.bf16.msra.mxu0 %v518
        %528 = vmatmul.bf16.gmra.mxu0 %v515
        %v529 = vpop.f32.mrf.mxu0
        %v530 = vadd.f32 0.0, %v529
        %v531 = vpop.f32.mrf.mxu0
        %532 = vdwg.mxu0
        %v533 = vrcp.pop %v510
        %v534 = vmul.f32 %v530, %v533
        %v535 = vpack.c.bf16 %v534, %v534
        %v536 = vld [vmem:[#allocation8 + $0x8] sm:$0xf]
        %v538 = vsel %vm321, %v535, 0
        %v541 = vsel %vm359, %v536, 0
        %543 = vmatpush.bf16.msra.mxu0 0
        %544 = vmatpush.bf16.msra.mxu0 0
        %545 = vmatpush.bf16.msra.mxu0 0
        %546 = vmatpush.bf16.msra.mxu0 0
        %547 = vmatpush.bf16.msra.mxu0 0
        %548 = vmatpush.bf16.msra.mxu0 0
        %549 = vmatpush.bf16.msra.mxu0 0
        %550 = vmatpush.bf16.msra.mxu0 %v541
        %551 = vmatmul.bf16.gmra.mxu0 %v538
        %v552 = vpop.f32.mrf.mxu0
        %v553 = vadd.f32 0.0, %v552
        %v554 = vpop.f32.mrf.mxu0
        %555 = vdwg.mxu0
        %v556 = vadd.f32 %v476, %v553
        %557 = vrot.lane.b32.xlu0 %v382, 104
        %v558 = vpop.permute.xlu0 %557
        %559 = vrot.lane.b32.xlu0 %v353, 104
        %v560 = vpop.permute.xlu0 %559
        %v562 = vsel %vm321, %v558, 0
        %v565 = vsel %vm321, %v560, 0
        %567 = vmatpush.bf16.xpose.msra.mxu0 0
        %568 = vmatpush.bf16.xpose.msra.mxu0 0
        %569 = vmatpush.bf16.xpose.msra.mxu0 0
        %570 = vmatpush.bf16.xpose.msra.mxu0 0
        %571 = vmatpush.bf16.xpose.msra.mxu0 0
        %572 = vmatpush.bf16.xpose.msra.mxu0 0
        %573 = vmatpush.bf16.xpose.msra.mxu0 0
        %574 = vmatpush.bf16.xpose.msra.mxu0 %v565
        %575 = vmatmul.bf16.gmra.mxu0 %v562
        %v576 = vpop.f32.mrf.mxu0
        %v577 = vadd.f32 0.0, %v576
        %v578 = vpop.f32.mrf.mxu0
        %579 = vdwg.mxu0
        %v580 = vsel %vm321, %v577, -inf
        %581 = vmax.xlane.f32.xlu0 %v580
        %v582 = vpop.xlane.xlu0 %581
        %v583 = vsub.f32 %v577, %v582
        %v584 = vmul.f32 %v583, 1.442695
        %v585 = vpow.pop %v584
        %v586 = vsel %vm321, %v585, 0.0
        %587 = vadd.xlane.f32.xlu0 %v586
        %v588 = vpop.xlane.xlu0 %587
        %v589 = vpack.c.bf16 %v585, %v585
        %590 = vrot.lane.b32.xlu0 %v353, 72
        %v591 = vpop.permute.xlu0 %590
        %v593 = vsel %vm321, %v589, 0
        %v596 = vsel %vm359, %v591, 0
        %598 = vmatpush.bf16.msra.mxu0 0
        %599 = vmatpush.bf16.msra.mxu0 0
        %600 = vmatpush.bf16.msra.mxu0 0
        %601 = vmatpush.bf16.msra.mxu0 0
        %602 = vmatpush.bf16.msra.mxu0 0
        %603 = vmatpush.bf16.msra.mxu0 0
        %604 = vmatpush.bf16.msra.mxu0 0
        %605 = vmatpush.bf16.msra.mxu0 %v596
        %606 = vmatmul.bf16.gmra.mxu0 %v593
        %v607 = vpop.f32.mrf.mxu0
        %v608 = vadd.f32 0.0, %v607
        %v609 = vpop.f32.mrf.mxu0
        %610 = vdwg.mxu0
        %v611 = vrcp.pop %v588
        %v612 = vmul.f32 %v608, %v611
        %v613 = vpack.c.bf16 %v612, %v612
        %v614 = vld [vmem:[#allocation8 + $0xc] sm:$0xf]
        %v616 = vsel %vm321, %v613, 0
        %v619 = vsel %vm359, %v614, 0
        %621 = vmatpush.bf16.msra.mxu0 0
        %622 = vmatpush.bf16.msra.mxu0 0
        %623 = vmatpush.bf16.msra.mxu0 0
        %624 = vmatpush.bf16.msra.mxu0 0
        %625 = vmatpush.bf16.msra.mxu0 0
        %626 = vmatpush.bf16.msra.mxu0 0
        %627 = vmatpush.bf16.msra.mxu0 0
        %628 = vmatpush.bf16.msra.mxu0 %v619
        %629 = vmatmul.bf16.gmra.mxu0 %v616
        %v630 = vpop.f32.mrf.mxu0
        %v631 = vadd.f32 0.0, %v630
        %v632 = vpop.f32.mrf.mxu0
        %633 = vdwg.mxu0
        %v634 = vadd.f32 %v556, %v631
        %635 = vst.msk [vmem:[%s234] sm:$0xff] %vm302, %v634
        %s636 = sand.u32 %s111, 1
        %s637 = scalar_lea.sflag [#allocation5], %s636
        %s638 = sand.u32 %s111, 1
        %s639 = smul.addr %s638, 8
        %s640 = scalar_lea.vmem [#allocation9], %s639
        // Predicated region
        $region49: #{tpu_custom_call.1} parent=31 // pred_check
          %p641 = pneg %p121
        $region50: #{tpu_custom_call.1} parent=31 // pred_check_branch
          %643 = sbr.rel (%p641) target = $region52
        $region51: #{tpu_custom_call.1} parent=31 // pred_region
          %645 = vsyncadd %s637, 0
          %s646 = sadd.s32 %s26, %s25
          %s647 = smul.addr %s646, 8
          %s648 = scalar_lea.hbm %s3, %s647
          %s650 = sshll.u32 %s640, 4
          %s651 = int_to_ptr.vmem [resolvable:$true] %s650
          %s652 = sshll.u32 %s648, 4
          %s653 = int_to_ptr.hbm [resolvable:$true] %s652
          %655 = dma.vmem_to_hbm [thread:$0]  %s651, 128, %s653, %s637
        $region52: #{tpu_custom_call.1} parent=31 // pred_fallthru
          _
      $region32: #{tpu_custom_call.1} parent=5 // pred_fallthru
        _
      %p656 = scmp.le.s32.totalorder 2, %s16
      // Predicated region
      $region53: #{tpu_custom_call.1} parent=5 // pred_check
        %p657 = pneg %p656
      $region54: #{tpu_custom_call.1} parent=5 // pred_check_branch
        %659 = sbr.rel (%p657) target = $region56
      $region55: #{tpu_custom_call.1} parent=5 // pred_region
        %s660 = ssub.s32 %s16, 2
        // Predicated region
        $region57: #{tpu_custom_call.1} parent=55 // pred_check
          %p661 = pneg %p127
        $region58: #{tpu_custom_call.1} parent=55 // pred_check_branch
          %663 = sbr.rel (%p661) target = $region60
        $region59: #{tpu_custom_call.1} parent=55 // pred_region
          %s664 = sand.u32 %s112, 1
          %s665 = scalar_lea.sflag [#allocation5], %s664
          %s666 = sand.u32 %s112, 1
          %s667 = smul.addr %s666, 8
          %s668 = scalar_lea.vmem [#allocation9], %s667
          %670 = dma.done %s665, 128
        $region60: #{tpu_custom_call.1} parent=55 // pred_fallthru
          _
      $region56: #{tpu_custom_call.1} parent=5 // pred_fallthru
        _
    $region6: #{tpu_custom_call.1} parent=1 // loop_footer
      %s20 = sadd.s32 1, %s16
    $region7: #{tpu_custom_call.1} parent=1 // loop_footer_branch
      %15 = sbr.rel target = $region3
    $region8: #{tpu_custom_call.1} parent=1 // loop_exit
      _
    %671 = vsyncpa [#allocation4], 1
    %s672 = scalar_lea.sflag [#allocation4], 1
    %673 = vsyncpa %s672, 1
    %674 = vsyncpa [#allocation7], 1
    %675 = vsyncpa [#allocation5], 1
    %s676 = scalar_lea.sflag [#allocation5], 1
    %677 = vsyncpa %s676, 1

</llo_original>
